<compile_context>
chip_gen: v5e
topology: v5e:2x2
jax: 0.10.0
libtpu: 0.0.40
codegen_flags: <defaults>
</compile_context>

<pallas_src>
import functools

import jax
import jax.numpy as jnp
from jax.experimental import pallas as pl
from jax.experimental.pallas import tpu as pltpu


def _round_up(v, m):
    return (v + m - 1) // m * m


def autoencoder_kernel(x_ref, w1_ref, b1_ref, w2_ref, b2_ref,
                       w3_ref, b3_ref, w4_ref, b4_ref, o_ref, *, mxu_dtype):
    """Whole 4-layer MLP for one batch tile; all weights VMEM-resident."""
    x = x_ref[...]
    if mxu_dtype is not None:
        a1, w1 = x.astype(mxu_dtype), w1_ref[...].astype(mxu_dtype)
    else:
        a1, w1 = x, w1_ref[...]
    h = jax.nn.sigmoid(
        jnp.dot(a1, w1, preferred_element_type=jnp.float32) + b1_ref[...])

    # fc2 / fc3 are tiny (20x10 / 10x20) and their inputs never touch HBM:
    # keep them fully f32 (no accuracy loss, negligible MXU work).
    h = jax.nn.sigmoid(
        jnp.dot(h, w2_ref[...], preferred_element_type=jnp.float32) + b2_ref[...])
    h = jax.nn.sigmoid(
        jnp.dot(h, w3_ref[...], preferred_element_type=jnp.float32) + b3_ref[...])

    if mxu_dtype is not None:
        a4, w4 = h.astype(mxu_dtype), w4_ref[...].astype(mxu_dtype)
    else:
        a4, w4 = h, w4_ref[...]
    y = jnp.dot(a4, w4, preferred_element_type=jnp.float32) + b4_ref[...]
    o_ref[...] = y.astype(o_ref.dtype)


def _tpu_hw_info():
    """Return (per-core VMEM capacity bytes, dual_tensorcore) with safe fallbacks."""
    kind = ""
    try:
        kind = jax.devices()[0].device_kind.lower()
    except Exception:
        pass
    dual_core = "v7" in kind
    if dual_core:
        return 64 << 20, True                       # v7x: 64 MiB per TensorCore
    vmem_cap = None
    try:
        vmem_cap = int(pltpu.get_tpu_info().vmem_capacity_bytes)
    except Exception:
        vmem_cap = None
    if not vmem_cap or vmem_cap < (16 << 20):
        if any(t in kind for t in ("v4", "v5", "v6")):
            vmem_cap = 128 << 20                    # 128 MiB parts
        else:
            vmem_cap = 64 << 20                     # unknown: stay conservative
    return min(vmem_cap, 128 << 20), False


def _choose_batch_tile(B, per_row_bytes, w_bytes, vmem_cap, dual_core, batch_tile):
    """Largest batch tile fitting the per-core VMEM budget (weights counted once
    per core, input/output slabs double-buffered, f32 fc4 accumulator counted)."""
    budget = max(int(vmem_cap * 0.78) - 2 * w_bytes, 4 << 20)
    max_tile = max(8, (budget // per_row_bytes) // 8 * 8)
    b8 = _round_up(B, 8)
    tile = min(max_tile, b8)
    if batch_tile is not None:
        tile = min(tile, max(8, _round_up(batch_tile, 8)))
    tile = max(8, (tile // 8) * 8)
    # Dual-TensorCore (v7x) only: keep >= 2 "parallel" grid steps when possible
    # so both cores get work.  Single-TC chips keep the largest tile that fits.
    if dual_core and b8 >= 16 and tile > b8 // 2:
        tile = max(8, _round_up(pl.cdiv(b8, 2), 8))
    return tile


@functools.partial(jax.jit, static_argnames=("batch_tile", "mxu_dtype", "out_dtype"))
def autoencoder_forward(x, params, *, batch_tile=None, mxu_dtype=jnp.bfloat16,
                        out_dtype=None):
    w1, b1, w2, b2, w3, b3, w4, b4 = params
    B, N = x.shape
    H1, H2 = w1.shape[1], w2.shape[1]
    out_dtype = x.dtype if out_dtype is None else jnp.dtype(out_dtype)

    x_isz = jnp.dtype(x.dtype).itemsize
    o_isz = jnp.dtype(out_dtype).itemsize
    mxu_isz = 0 if mxu_dtype is None else jnp.dtype(mxu_dtype).itemsize
    w_bytes = sum(int(a.size) * jnp.dtype(a.dtype).itemsize
                  for a in (w1, b1, w2, b2, w3, b3, w4, b4))

    vmem_cap, dual_core = _tpu_hw_info()
    # Per batch-row VMEM: double-buffered input + output slabs, f32 fc4
    # accumulator (+ one extra f32-sized temp for the bias-add / cast), and the
    # in-kernel low-precision copy of the x tile.
    per_row = N * (2 * x_isz + 2 * o_isz + 8 + mxu_isz)
    tile = _choose_batch_tile(B, per_row, w_bytes, vmem_cap, dual_core, batch_tile)
    grid = (pl.cdiv(B, tile),)

    vmem_need = tile * per_row + 2 * w_bytes + (8 << 20)
    vmem_limit = int(min(max(vmem_need, 32 << 20), vmem_cap))

    flops = 2 * B * (N * H1 + H1 * H2 + H2 * H1 + H1 * N)
    transcendentals = B * (H1 + H2 + H1)
    bytes_accessed = B * N * (x_isz + o_isz) + w_bytes
    cost = pl.CostEstimate(flops=int(flops), transcendentals=int(transcendentals),
                           bytes_accessed=int(bytes_accessed))

    resident = lambda shape: pl.BlockSpec(shape, lambda i: (0, 0))  # weight resident

    out = pl.pallas_call(
        functools.partial(autoencoder_kernel, mxu_dtype=mxu_dtype),
        out_shape=jax.ShapeDtypeStruct((B, N), out_dtype),
        grid_spec=pltpu.PrefetchScalarGridSpec(
            num_scalar_prefetch=0,
            grid=grid,
            in_specs=[
                pl.BlockSpec((tile, N), lambda i: (i, 0)),   # x batch tile, true N
                resident(w1.shape), resident(b1.shape),
                resident(w2.shape), resident(b2.shape),
                resident(w3.shape), resident(b3.shape),
                resident(w4.shape), resident(b4.shape),
            ],
            out_specs=pl.BlockSpec((tile, N), lambda i: (i, 0)),
        ),
        compiler_params=pltpu.CompilerParams(
            dimension_semantics=("parallel",),
            vmem_limit_bytes=vmem_limit),
        cost_estimate=cost,
    )(x, w1, b1, w2, b2, w3, b3, w4, b4)
    return out


def init_params(key, n_movies, h1=20, h2=10, dtype=jnp.float32):
    """Deterministic synthetic parameters (PyTorch Linear init, pre-transposed)."""
    ks = jax.random.split(key, 8)

    def linear(kw, kb, fan_in, fan_out):
        bound = 1.0 / jnp.sqrt(fan_in)
        w = jax.random.uniform(kw, (fan_in, fan_out), dtype, -bound, bound)
        b = jax.random.uniform(kb, (1, fan_out), dtype, -bound, bound)
        return w, b

    w1, b1 = linear(ks[0], ks[1], n_movies, h1)
    w2, b2 = linear(ks[2], ks[3], h1, h2)
    w3, b3 = linear(ks[4], ks[5], h2, h1)
    w4, b4 = linear(ks[6], ks[7], h1, n_movies)
    return (w1, b1, w2, b2, w3, b3, w4, b4)


def reference_forward(x, params):
    w1, b1, w2, b2, w3, b3, w4, b4 = params
    h = jax.nn.sigmoid(x @ w1 + b1)
    h = jax.nn.sigmoid(h @ w2 + b2)
    h = jax.nn.sigmoid(h @ w3 + b3)
    return h @ w4 + b4


if __name__ == "__main__":
    key = jax.random.PRNGKey(0)
    kx, kp = jax.random.split(key)

    # Small MovieLens-flavoured shapes: N deliberately NOT a multiple of 128
    # (exercises the masked lane tail) and B deliberately not a multiple of the
    # forced tile (exercises the ragged last batch block).
    B, N_MOVIES = 40, 200
    x = jax.random.uniform(kx, (B, N_MOVIES), jnp.float32, 0.0, 5.0)  # ratings-like
    params = init_params(kp, N_MOVIES)
    ref = reference_forward(x, params)

    # Exact path (f32 MXU operands), auto tile -> single grid step.
    out_f32 = jax.block_until_ready(autoencoder_forward(x, params, mxu_dtype=None))
    assert out_f32.shape == (B, N_MOVIES)
    assert jnp.allclose(out_f32, ref, atol=1e-4, rtol=1e-5), "f32 mismatch vs reference"

    # Default fast path: bf16 MXU operands on fc1/fc4, forced small tile so the
    # grid has a ragged final block (40 rows over tiles of 16).
    out = jax.block_until_ready(autoencoder_forward(x, params, batch_tile=16))
    assert out.shape == (B, N_MOVIES)
    assert jnp.allclose(out, ref, atol=5e-2, rtol=5e-2), \
        "bf16-MXU path deviates too far from reference"

    print("KERNEL_OK")
</pallas_src>

<mosaic_0001>
module attributes {stable_mosaic.version = 11 : i64} {
  func.func @autoencoder_kernel(%arg0: i32, %arg1: memref<40x200xf32, #tpu.memory_space<vmem>>, %arg2: memref<200x20xf32, #tpu.memory_space<vmem>>, %arg3: memref<1x20xf32, #tpu.memory_space<vmem>>, %arg4: memref<20x10xf32, #tpu.memory_space<vmem>>, %arg5: memref<1x10xf32, #tpu.memory_space<vmem>>, %arg6: memref<10x20xf32, #tpu.memory_space<vmem>>, %arg7: memref<1x20xf32, #tpu.memory_space<vmem>>, %arg8: memref<20x200xf32, #tpu.memory_space<vmem>>, %arg9: memref<1x200xf32, #tpu.memory_space<vmem>>, %arg10: memref<40x200xf32, #tpu.memory_space<vmem>>) attributes {dimension_semantics = [#tpu.dimension_semantics<parallel>], iteration_bounds = array<i64: 1>, scalar_prefetch = 0 : i64, scratch_operands = 0 : i64, tpu.core_type = #tpu.core_type<tc>, window_params = [{transform_indices = @transform_0, window_bounds = array<i64: 40, 200>}, {pipeline_mode = #tpu.pipeline_mode<synchronous>, transform_indices = @transform_1, window_bounds = array<i64: 200, 20>}, {pipeline_mode = #tpu.pipeline_mode<synchronous>, transform_indices = @transform_2, window_bounds = array<i64: 1, 20>}, {pipeline_mode = #tpu.pipeline_mode<synchronous>, transform_indices = @transform_3, window_bounds = array<i64: 20, 10>}, {pipeline_mode = #tpu.pipeline_mode<synchronous>, transform_indices = @transform_4, window_bounds = array<i64: 1, 10>}, {pipeline_mode = #tpu.pipeline_mode<synchronous>, transform_indices = @transform_5, window_bounds = array<i64: 10, 20>}, {pipeline_mode = #tpu.pipeline_mode<synchronous>, transform_indices = @transform_6, window_bounds = array<i64: 1, 20>}, {pipeline_mode = #tpu.pipeline_mode<synchronous>, transform_indices = @transform_7, window_bounds = array<i64: 20, 200>}, {pipeline_mode = #tpu.pipeline_mode<synchronous>, transform_indices = @transform_8, window_bounds = array<i64: 1, 200>}, {transform_indices = @transform_9, window_bounds = array<i64: 40, 200>}]} {
    %c0 = arith.constant 0 : index
    %c0_0 = arith.constant 0 : index
    %0 = vector.load %arg1[%c0, %c0_0] : memref<40x200xf32, #tpu.memory_space<vmem>>, vector<40x200xf32>
    %c0_1 = arith.constant 0 : index
    %c0_2 = arith.constant 0 : index
    %1 = vector.load %arg2[%c0_1, %c0_2] : memref<200x20xf32, #tpu.memory_space<vmem>>, vector<200x20xf32>
    %cst = arith.constant dense<0.000000e+00> : vector<40x20xf32>
    %2 = tpu.matmul %0, %1, %cst {dimension_numbers = #tpu.dot_dimension_numbers<[1], [0], [0], [1], [0, 0, 1, 1], [], []>} : vector<40x200xf32>, vector<200x20xf32>, vector<40x20xf32> -> vector<40x20xf32>
    %c0_3 = arith.constant 0 : index
    %c0_4 = arith.constant 0 : index
    %3 = vector.load %arg3[%c0_3, %c0_4] : memref<1x20xf32, #tpu.memory_space<vmem>>, vector<1x20xf32>
    %4 = vector.broadcast %3 : vector<1x20xf32> to vector<40x20xf32>
    %5 = arith.addf %2, %4 : vector<40x20xf32>
    %6 = arith.negf %5 : vector<40x20xf32>
    %7 = math.exp %6 : vector<40x20xf32>
    %cst_5 = arith.constant 1.000000e+00 : f32
    %8 = vector.broadcast %cst_5 : f32 to vector<40x20xf32>
    %9 = arith.addf %8, %7 : vector<40x20xf32>
    %10 = arith.divf %8, %9 : vector<40x20xf32>
    %c0_6 = arith.constant 0 : index
    %c0_7 = arith.constant 0 : index
    %11 = vector.load %arg4[%c0_6, %c0_7] : memref<20x10xf32, #tpu.memory_space<vmem>>, vector<20x10xf32>
    %cst_8 = arith.constant dense<0.000000e+00> : vector<40x10xf32>
    %12 = tpu.matmul %10, %11, %cst_8 {dimension_numbers = #tpu.dot_dimension_numbers<[1], [0], [0], [1], [0, 0, 1, 1], [], []>} : vector<40x20xf32>, vector<20x10xf32>, vector<40x10xf32> -> vector<40x10xf32>
    %c0_9 = arith.constant 0 : index
    %c0_10 = arith.constant 0 : index
    %13 = vector.load %arg5[%c0_9, %c0_10] : memref<1x10xf32, #tpu.memory_space<vmem>>, vector<1x10xf32>
    %14 = vector.broadcast %13 : vector<1x10xf32> to vector<40x10xf32>
    %15 = arith.addf %12, %14 : vector<40x10xf32>
    %16 = arith.negf %15 : vector<40x10xf32>
    %17 = math.exp %16 : vector<40x10xf32>
    %cst_11 = arith.constant 1.000000e+00 : f32
    %18 = vector.broadcast %cst_11 : f32 to vector<40x10xf32>
    %19 = arith.addf %18, %17 : vector<40x10xf32>
    %20 = arith.divf %18, %19 : vector<40x10xf32>
    %c0_12 = arith.constant 0 : index
    %c0_13 = arith.constant 0 : index
    %21 = vector.load %arg6[%c0_12, %c0_13] : memref<10x20xf32, #tpu.memory_space<vmem>>, vector<10x20xf32>
    %cst_14 = arith.constant dense<0.000000e+00> : vector<40x20xf32>
    %22 = tpu.matmul %20, %21, %cst_14 {dimension_numbers = #tpu.dot_dimension_numbers<[1], [0], [0], [1], [0, 0, 1, 1], [], []>} : vector<40x10xf32>, vector<10x20xf32>, vector<40x20xf32> -> vector<40x20xf32>
    %c0_15 = arith.constant 0 : index
    %c0_16 = arith.constant 0 : index
    %23 = vector.load %arg7[%c0_15, %c0_16] : memref<1x20xf32, #tpu.memory_space<vmem>>, vector<1x20xf32>
    %24 = vector.broadcast %23 : vector<1x20xf32> to vector<40x20xf32>
    %25 = arith.addf %22, %24 : vector<40x20xf32>
    %26 = arith.negf %25 : vector<40x20xf32>
    %27 = math.exp %26 : vector<40x20xf32>
    %cst_17 = arith.constant 1.000000e+00 : f32
    %28 = vector.broadcast %cst_17 : f32 to vector<40x20xf32>
    %29 = arith.addf %28, %27 : vector<40x20xf32>
    %30 = arith.divf %28, %29 : vector<40x20xf32>
    %c0_18 = arith.constant 0 : index
    %c0_19 = arith.constant 0 : index
    %31 = vector.load %arg8[%c0_18, %c0_19] : memref<20x200xf32, #tpu.memory_space<vmem>>, vector<20x200xf32>
    %cst_20 = arith.constant dense<0.000000e+00> : vector<40x200xf32>
    %32 = tpu.matmul %30, %31, %cst_20 {dimension_numbers = #tpu.dot_dimension_numbers<[1], [0], [0], [1], [0, 0, 1, 1], [], []>} : vector<40x20xf32>, vector<20x200xf32>, vector<40x200xf32> -> vector<40x200xf32>
    %c0_21 = arith.constant 0 : index
    %c0_22 = arith.constant 0 : index
    %33 = vector.load %arg9[%c0_21, %c0_22] : memref<1x200xf32, #tpu.memory_space<vmem>>, vector<1x200xf32>
    %34 = vector.broadcast %33 : vector<1x200xf32> to vector<40x200xf32>
    %35 = arith.addf %32, %34 : vector<40x200xf32>
    %c0_23 = arith.constant 0 : index
    %c0_24 = arith.constant 0 : index
    %36 = vector.load %arg10[%c0_23, %c0_24] : memref<40x200xf32, #tpu.memory_space<vmem>>, vector<40x200xf32>
    tpu.vector_store %arg10[%c0_23, %c0_24], %35 {strides = array<i32>} : memref<40x200xf32, #tpu.memory_space<vmem>>, vector<40x200xf32>,
    return
  }
  func.func @transform_0(%arg0: i32) -> (i32, i32) {
    %c0_i32 = arith.constant 0 : i32
    %c0_i32_0 = arith.constant 0 : i32
    return %arg0, %c0_i32 : i32, i32
  }
  func.func @transform_1(%arg0: i32) -> (i32, i32) {
    %c0_i32 = arith.constant 0 : i32
    %c0_i32_0 = arith.constant 0 : i32
    %c0_i32_1 = arith.constant 0 : i32
    return %c0_i32, %c0_i32_0 : i32, i32
  }
  func.func @transform_2(%arg0: i32) -> (i32, i32) {
    %c0_i32 = arith.constant 0 : i32
    %c0_i32_0 = arith.constant 0 : i32
    %c0_i32_1 = arith.constant 0 : i32
    return %c0_i32, %c0_i32_0 : i32, i32
  }
  func.func @transform_3(%arg0: i32) -> (i32, i32) {
    %c0_i32 = arith.constant 0 : i32
    %c0_i32_0 = arith.constant 0 : i32
    %c0_i32_1 = arith.constant 0 : i32
    return %c0_i32, %c0_i32_0 : i32, i32
  }
  func.func @transform_4(%arg0: i32) -> (i32, i32) {
    %c0_i32 = arith.constant 0 : i32
    %c0_i32_0 = arith.constant 0 : i32
    %c0_i32_1 = arith.constant 0 : i32
    return %c0_i32, %c0_i32_0 : i32, i32
  }
  func.func @transform_5(%arg0: i32) -> (i32, i32) {
    %c0_i32 = arith.constant 0 : i32
    %c0_i32_0 = arith.constant 0 : i32
    %c0_i32_1 = arith.constant 0 : i32
    return %c0_i32, %c0_i32_0 : i32, i32
  }
  func.func @transform_6(%arg0: i32) -> (i32, i32) {
    %c0_i32 = arith.constant 0 : i32
    %c0_i32_0 = arith.constant 0 : i32
    %c0_i32_1 = arith.constant 0 : i32
    return %c0_i32, %c0_i32_0 : i32, i32
  }
  func.func @transform_7(%arg0: i32) -> (i32, i32) {
    %c0_i32 = arith.constant 0 : i32
    %c0_i32_0 = arith.constant 0 : i32
    %c0_i32_1 = arith.constant 0 : i32
    return %c0_i32, %c0_i32_0 : i32, i32
  }
  func.func @transform_8(%arg0: i32) -> (i32, i32) {
    %c0_i32 = arith.constant 0 : i32
    %c0_i32_0 = arith.constant 0 : i32
    %c0_i32_1 = arith.constant 0 : i32
    return %c0_i32, %c0_i32_0 : i32, i32
  }
  func.func @transform_9(%arg0: i32) -> (i32, i32) {
    %c0_i32 = arith.constant 0 : i32
    %c0_i32_0 = arith.constant 0 : i32
    return %arg0, %c0_i32 : i32, i32
  }
}

</mosaic_0001>

<llo_original>
// kernel: autoencoder_forward.1
$region0: #{autoencoder_forward.1}
  #allocation0 [shape = 'u32[]', space=smem, size = 0x4, offset = 0x4, fixed_abs, tag = 'smem constant byte address 0x4 - core index']
  #allocation1 [shape = 'u32[72,128]{1,0:T(1,128)}', space=vmem, size = 0x9000, scoped, tag = 'internal scratch']
  %s0 = inlined_call_operand.vmem [shape: f32[40,200], index: 0, kind: input, shape index: {}]
  %s1 = inlined_call_operand.vmem [shape: f32[200,20], index: 1, kind: input, shape index: {}]
  %s2 = inlined_call_operand.vmem [shape: f32[1,20], index: 2, kind: input, shape index: {}]
  %s3 = inlined_call_operand.vmem [shape: f32[20,10], index: 3, kind: input, shape index: {}]
  %s4 = inlined_call_operand.vmem [shape: f32[1,10], index: 4, kind: input, shape index: {}]
  %s5 = inlined_call_operand.vmem [shape: f32[10,20], index: 5, kind: input, shape index: {}]
  %s6 = inlined_call_operand.vmem [shape: f32[1,20], index: 6, kind: input, shape index: {}]
  %s7 = inlined_call_operand.vmem [shape: f32[20,200], index: 7, kind: input, shape index: {}]
  %s8 = inlined_call_operand.vmem [shape: f32[1,200], index: 8, kind: input, shape index: {}]
  %s9 = inlined_call_operand.hbm [shape: f32[40,200], index: 9, kind: output, shape index: {}]
  %s10 = sld [smem:[#allocation0]]
  $region46: #{autoencoder_forward.1} parent=0
    _
  %s12 = ssub.s32 1, %s10
  %s13 = scalar_select 0, %s12, %s10
  $region1: #{autoencoder_forward.1} parent=0
    #allocation2 [shape = 'u8[40960]{0}', space=vmem, size = 0xa000, scoped, tag = 'output window, operand 0, single buffered']
    #allocation3 [shape = 's32[1]{0}', space=sflag, size = 0x4, scoped, tag = 'scoped memory for autoencoder_forward.1']
    %14 = vsyncpa [#allocation3], 0
    // Predicated region
    $region2: #{autoencoder_forward.1} parent=1 // pred_check
      _
    $region3: #{autoencoder_forward.1} parent=1 // pred_check_branch
      %16 = sbr.rel (0) target = $region5
    $region4: #{autoencoder_forward.1} parent=1 // pred_region
      _
    $region5: #{autoencoder_forward.1} parent=1 // pred_fallthru
      _
    // Predicated region
    $region6: #{autoencoder_forward.1} parent=1 // pred_check
      _
    $region7: #{autoencoder_forward.1} parent=1 // pred_check_branch
      %18 = sbr.rel (0) target = $region9
    $region8: #{autoencoder_forward.1} parent=1 // pred_region
      _
    $region9: #{autoencoder_forward.1} parent=1 // pred_fallthru
      _
    // Predicated region
    $region10: #{autoencoder_forward.1} parent=1 // pred_check
      _
    $region11: #{autoencoder_forward.1} parent=1 // pred_check_branch
      %20 = sbr.rel (0) target = $region13
    $region12: #{autoencoder_forward.1} parent=1 // pred_region
      _
    $region13: #{autoencoder_forward.1} parent=1 // pred_fallthru
      _
    // Predicated region
    $region14: #{autoencoder_forward.1} parent=1 // pred_check
      _
    $region15: #{autoencoder_forward.1} parent=1 // pred_check_branch
      %22 = sbr.rel (0) target = $region17
    $region16: #{autoencoder_forward.1} parent=1 // pred_region
      _
    $region17: #{autoencoder_forward.1} parent=1 // pred_fallthru
      _
    // Predicated region
    $region18: #{autoencoder_forward.1} parent=1 // pred_check
      _
    $region19: #{autoencoder_forward.1} parent=1 // pred_check_branch
      %24 = sbr.rel (0) target = $region21
    $region20: #{autoencoder_forward.1} parent=1 // pred_region
      _
    $region21: #{autoencoder_forward.1} parent=1 // pred_fallthru
      _
    // Predicated region
    $region22: #{autoencoder_forward.1} parent=1 // pred_check
      _
    $region23: #{autoencoder_forward.1} parent=1 // pred_check_branch
      %26 = sbr.rel (0) target = $region25
    $region24: #{autoencoder_forward.1} parent=1 // pred_region
      _
    $region25: #{autoencoder_forward.1} parent=1 // pred_fallthru
      _
    // Predicated region
    $region26: #{autoencoder_forward.1} parent=1 // pred_check
      _
    $region27: #{autoencoder_forward.1} parent=1 // pred_check_branch
      %28 = sbr.rel (0) target = $region29
    $region28: #{autoencoder_forward.1} parent=1 // pred_region
      _
    $region29: #{autoencoder_forward.1} parent=1 // pred_fallthru
      _
    // Predicated region
    $region30: #{autoencoder_forward.1} parent=1 // pred_check
      _
    $region31: #{autoencoder_forward.1} parent=1 // pred_check_branch
      %30 = sbr.rel (0) target = $region33
    $region32: #{autoencoder_forward.1} parent=1 // pred_region
      _
    $region33: #{autoencoder_forward.1} parent=1 // pred_fallthru
      _
    // Predicated region
    $region34: #{autoencoder_forward.1} parent=1 // pred_check
      _
    $region35: #{autoencoder_forward.1} parent=1 // pred_check_branch
      %32 = sbr.rel (0) target = $region37
    $region36: #{autoencoder_forward.1} parent=1 // pred_region
      _
    $region37: #{autoencoder_forward.1} parent=1 // pred_fallthru
      _
    %v33 = vld [vmem:[%s0] sm:$0xff]
    %v34 = vld [vmem:[%s0 + $0x8] sm:$0xff]
    %v35 = vld [vmem:[%s0 + $0x10] sm:$0xff]
    %v36 = vld [vmem:[%s0 + $0x18] sm:$0xff]
    %v37 = vld [vmem:[%s0 + $0x20] sm:$0xff]
    %v38 = vld [vmem:[%s0 + $0x28] sm:$0xff]
    %v39 = vld [vmem:[%s0 + $0x30] sm:$0xff]
    %v40 = vld [vmem:[%s0 + $0x38] sm:$0xff]
    %v41 = vld [vmem:[%s0 + $0x40] sm:$0xff]
    %v42 = vld [vmem:[%s0 + $0x48] sm:$0xff]
    %v43 = vld [vmem:[%s1] sm:$0xff]
    %v44 = vld [vmem:[%s1 + $0x8] sm:$0xff]
    %v45 = vld [vmem:[%s1 + $0x10] sm:$0xff]
    %v46 = vld [vmem:[%s1 + $0x18] sm:$0xff]
    %v47 = vld [vmem:[%s1 + $0x20] sm:$0xff]
    %v48 = vld [vmem:[%s1 + $0x28] sm:$0xff]
    %v49 = vld [vmem:[%s1 + $0x30] sm:$0xff]
    %v50 = vld [vmem:[%s1 + $0x38] sm:$0xff]
    %v51 = vld [vmem:[%s1 + $0x40] sm:$0xff]
    %v52 = vld [vmem:[%s1 + $0x48] sm:$0xff]
    %v53 = vld [vmem:[%s1 + $0x50] sm:$0xff]
    %v54 = vld [vmem:[%s1 + $0x58] sm:$0xff]
    %v55 = vld [vmem:[%s1 + $0x60] sm:$0xff]
    %v56 = vld [vmem:[%s1 + $0x68] sm:$0xff]
    %v57 = vld [vmem:[%s1 + $0x70] sm:$0xff]
    %v58 = vld [vmem:[%s1 + $0x78] sm:$0xff]
    %v59 = vld [vmem:[%s1 + $0x80] sm:$0xff]
    %v60 = vld [vmem:[%s1 + $0x88] sm:$0xff]
    %v61 = vld [vmem:[%s1 + $0x90] sm:$0xff]
    %v62 = vld [vmem:[%s1 + $0x98] sm:$0xff]
    %v63 = vld [vmem:[%s1 + $0xa0] sm:$0xff]
    %v64 = vld [vmem:[%s1 + $0xa8] sm:$0xff]
    %v65 = vld [vmem:[%s1 + $0xb0] sm:$0xff]
    %v66 = vld [vmem:[%s1 + $0xb8] sm:$0xff]
    %v67 = vld [vmem:[%s1 + $0xc0] sm:$0xff]
    %v68 = vld [vmem:[%s2] sm:$0x1]
    %v70 = vperm.slane %v68, 0
    %vm72 = vcmask 588800
    %v74 = vsel %vm72, %v34, 0
    %v77 = vsel %vm72, %v36, 0
    %v80 = vsel %vm72, %v38, 0
    %v83 = vsel %vm72, %v40, 0
    %v86 = vsel %vm72, %v42, 0
    %88 = vmatpush.msra.mxu0 %v58
    %89 = vmatpush.msra.mxu0 %v57
    %90 = vmatpush.msra.mxu0 %v56
    %91 = vmatpush.msra.mxu0 %v55
    %92 = vmatpush.msra.mxu0 %v54
    %93 = vmatpush.msra.mxu0 %v53
    %94 = vmatpush.msra.mxu0 %v52
    %95 = vmatpush.msra.mxu0 %v51
    %96 = vmatpush.msra.mxu0 %v50
    %97 = vmatpush.msra.mxu0 %v49
    %98 = vmatpush.msra.mxu0 %v48
    %99 = vmatpush.msra.mxu0 %v47
    %100 = vmatpush.msra.mxu0 %v46
    %101 = vmatpush.msra.mxu0 %v45
    %102 = vmatpush.msra.mxu0 %v44
    %103 = vmatpush.msra.mxu0 %v43
    %104 = vmatmul.f32.gmra.mxu0 %v33
    %v105 = vpop.f32.mrf.mxu0
    %v106 = vadd.f32 %v70, %v105
    %107 = vmatmul.f32.gmra.mxu0 %v35
    %v108 = vpop.f32.mrf.mxu0
    %v109 = vadd.f32 %v70, %v108
    %110 = vmatmul.f32.gmra.mxu0 %v37
    %v111 = vpop.f32.mrf.mxu0
    %v112 = vadd.f32 %v70, %v111
    %113 = vmatmul.f32.gmra.mxu0 %v39
    %v114 = vpop.f32.mrf.mxu0
    %v115 = vadd.f32 %v70, %v114
    %116 = vmatmul.f32.gmra.mxu0 %v41
    %v117 = vpop.f32.mrf.mxu0
    %v118 = vadd.f32 %v70, %v117
    %119 = vdwg.mxu0
    %120 = vmatpush.msra.mxu0 0.0
    %121 = vmatpush.msra.mxu0 0.0
    %122 = vmatpush.msra.mxu0 0.0
    %123 = vmatpush.msra.mxu0 0.0
    %124 = vmatpush.msra.mxu0 0.0
    %125 = vmatpush.msra.mxu0 0.0
    %126 = vmatpush.msra.mxu0 0.0
    %127 = vmatpush.msra.mxu0 %v67
    %128 = vmatpush.msra.mxu0 %v66
    %129 = vmatpush.msra.mxu0 %v65
    %130 = vmatpush.msra.mxu0 %v64
    %131 = vmatpush.msra.mxu0 %v63
    %132 = vmatpush.msra.mxu0 %v62
    %133 = vmatpush.msra.mxu0 %v61
    %134 = vmatpush.msra.mxu0 %v60
    %135 = vmatpush.msra.mxu0 %v59
    %136 = vmatmul.f32.gmra.mxu0 %v74
    %v137 = vpop.f32.mrf.mxu0
    %v138 = vadd.f32 %v106, %v137
    %139 = vmatmul.f32.gmra.mxu0 %v77
    %v140 = vpop.f32.mrf.mxu0
    %v141 = vadd.f32 %v109, %v140
    %142 = vmatmul.f32.gmra.mxu0 %v80
    %v143 = vpop.f32.mrf.mxu0
    %v144 = vadd.f32 %v112, %v143
    %145 = vmatmul.f32.gmra.mxu0 %v83
    %v146 = vpop.f32.mrf.mxu0
    %v147 = vadd.f32 %v115, %v146
    %148 = vmatmul.f32.gmra.mxu0 %v86
    %v149 = vpop.f32.mrf.mxu0
    %v150 = vadd.f32 %v118, %v149
    %151 = vdwg.mxu0
    %v152 = vxor.u32 %v138, 2147483648
    %v153 = vxor.u32 %v141, 2147483648
    %v154 = vxor.u32 %v144, 2147483648
    %v155 = vxor.u32 %v147, 2147483648
    %v156 = vxor.u32 %v150, 2147483648
    %v157 = vmul.f32 %v152, 1.442695
    %v158 = vpow.pop %v157
    %v159 = vmul.f32 %v153, 1.442695
    %v160 = vpow.pop %v159
    %v161 = vmul.f32 %v154, 1.442695
    %v162 = vpow.pop %v161
    %v163 = vmul.f32 %v155, 1.442695
    %v164 = vpow.pop %v163
    %v165 = vmul.f32 %v156, 1.442695
    %v166 = vpow.pop %v165
    %v167 = vadd.f32 %v158, 1.0
    %v168 = vadd.f32 %v160, 1.0
    %v169 = vadd.f32 %v162, 1.0
    %v170 = vadd.f32 %v164, 1.0
    %v171 = vadd.f32 %v166, 1.0
    %v172 = vrcp.pop %v167
    %v173 = vmul.f32 %v167, %v172
    %v174 = vsub.f32 1.0, %v173
    %v175 = vmul.f32 %v172, %v174
    %v176 = vadd.f32 %v172, %v175
    %vm177 = vweird.f32 %v167
    %vm178 = vweird.f32 %v172
    %vm179 = vmor %vm177, %vm178
    %v180 = vsel %vm179, %v172, %v176
    %v181 = vand.u32 2147483647, %v167
    %vm182 = vcmp.eq.f32.partialorder %v181, 8.507059e+37
    %v183 = vand.u32 %v167, 2147483648
    %v184 = vor.u32 1.1754944e-38, %v183
    %v185 = vsel %vm182, %v184, %v180
    %v186 = vmul.f32 1.0, %v185
    %v187 = vrcp.pop %v168
    %v188 = vmul.f32 %v168, %v187
    %v189 = vsub.f32 1.0, %v188
    %v190 = vmul.f32 %v187, %v189
    %v191 = vadd.f32 %v187, %v190
    %vm192 = vweird.f32 %v168
    %vm193 = vweird.f32 %v187
    %vm194 = vmor %vm192, %vm193
    %v195 = vsel %vm194, %v187, %v191
    %v196 = vand.u32 2147483647, %v168
    %vm197 = vcmp.eq.f32.partialorder %v196, 8.507059e+37
    %v198 = vand.u32 %v168, 2147483648
    %v199 = vor.u32 1.1754944e-38, %v198
    %v200 = vsel %vm197, %v199, %v195
    %v201 = vmul.f32 1.0, %v200
    %v202 = vrcp.pop %v169
    %v203 = vmul.f32 %v169, %v202
    %v204 = vsub.f32 1.0, %v203
    %v205 = vmul.f32 %v202, %v204
    %v206 = vadd.f32 %v202, %v205
    %vm207 = vweird.f32 %v169
    %vm208 = vweird.f32 %v202
    %vm209 = vmor %vm207, %vm208
    %v210 = vsel %vm209, %v202, %v206
    %v211 = vand.u32 2147483647, %v169
    %vm212 = vcmp.eq.f32.partialorder %v211, 8.507059e+37
    %v213 = vand.u32 %v169, 2147483648
    %v214 = vor.u32 1.1754944e-38, %v213
    %v215 = vsel %vm212, %v214, %v210
    %v216 = vmul.f32 1.0, %v215
    %v217 = vrcp.pop %v170
    %v218 = vmul.f32 %v170, %v217
    %v219 = vsub.f32 1.0, %v218
    %v220 = vmul.f32 %v217, %v219
    %v221 = vadd.f32 %v217, %v220
    %vm222 = vweird.f32 %v170
    %vm223 = vweird.f32 %v217
    %vm224 = vmor %vm222, %vm223
    %v225 = vsel %vm224, %v217, %v221
    %v226 = vand.u32 2147483647, %v170
    %vm227 = vcmp.eq.f32.partialorder %v226, 8.507059e+37
    %v228 = vand.u32 %v170, 2147483648
    %v229 = vor.u32 1.1754944e-38, %v228
    %v230 = vsel %vm227, %v229, %v225
    %v231 = vmul.f32 1.0, %v230
    %v232 = vrcp.pop %v171
    %v233 = vmul.f32 %v171, %v232
    %v234 = vsub.f32 1.0, %v233
    %v235 = vmul.f32 %v232, %v234
    %v236 = vadd.f32 %v232, %v235
    %vm237 = vweird.f32 %v171
    %vm238 = vweird.f32 %v232
    %vm239 = vmor %vm237, %vm238
    %v240 = vsel %vm239, %v232, %v236
    %v241 = vand.u32 2147483647, %v171
    %vm242 = vcmp.eq.f32.partialorder %v241, 8.507059e+37
    %v243 = vand.u32 %v171, 2147483648
    %v244 = vor.u32 1.1754944e-38, %v243
    %v245 = vsel %vm242, %v244, %v240
    %v246 = vmul.f32 1.0, %v245
    %v247 = vld [vmem:[%s3] sm:$0xff]
    %v248 = vld [vmem:[%s3 + $0x8] sm:$0xff]
    %v249 = vld [vmem:[%s3 + $0x10] sm:$0xf]
    %v250 = vld [vmem:[%s4] sm:$0x1]
    %v252 = vperm.slane %v250, 0
    %vm254 = vcmask 162816
    %v256 = vsel %vm254, %v186, 0
    %v259 = vsel %vm254, %v201, 0
    %v262 = vsel %vm254, %v216, 0
    %v265 = vsel %vm254, %v231, 0
    %v268 = vsel %vm254, %v246, 0
    %vm270 = vcmask 1043456
    %v272 = vsel %vm270, %v249, 0
    %274 = vmatpush.msra.mxu0 0.0
    %275 = vmatpush.msra.mxu0 0.0
    %276 = vmatpush.msra.mxu0 0.0
    %277 = vmatpush.msra.mxu0 0.0
    %278 = vmatpush.msra.mxu0 0.0
    %279 = vmatpush.msra.mxu0 0.0
    %280 = vmatpush.msra.mxu0 0.0
    %281 = vmatpush.msra.mxu0 0.0
    %282 = vmatpush.msra.mxu0 0.0
    %283 = vmatpush.msra.mxu0 0.0
    %284 = vmatpush.msra.mxu0 0.0
    %285 = vmatpush.msra.mxu0 0.0
    %286 = vmatpush.msra.mxu0 0.0
    %287 = vmatpush.msra.mxu0 %v272
    %288 = vmatpush.msra.mxu0 %v248
    %289 = vmatpush.msra.mxu0 %v247
    %290 = vmatmul.f32.gmra.mxu0 %v256
    %v291 = vpop.f32.mrf.mxu0
    %v292 = vadd.f32 %v252, %v291
    %293 = vmatmul.f32.gmra.mxu0 %v259
    %v294 = vpop.f32.mrf.mxu0
    %v295 = vadd.f32 %v252, %v294
    %296 = vmatmul.f32.gmra.mxu0 %v262
    %v297 = vpop.f32.mrf.mxu0
    %v298 = vadd.f32 %v252, %v297
    %299 = vmatmul.f32.gmra.mxu0 %v265
    %v300 = vpop.f32.mrf.mxu0
    %v301 = vadd.f32 %v252, %v300
    %302 = vmatmul.f32.gmra.mxu0 %v268
    %v303 = vpop.f32.mrf.mxu0
    %v304 = vadd.f32 %v252, %v303
    %305 = vdwg.mxu0
    %v306 = vxor.u32 %v292, 2147483648
    %v307 = vxor.u32 %v295, 2147483648
    %v308 = vxor.u32 %v298, 2147483648
    %v309 = vxor.u32 %v301, 2147483648
    %v310 = vxor.u32 %v304, 2147483648
    %v311 = vmul.f32 %v306, 1.442695
    %v312 = vpow.pop %v311
    %v313 = vmul.f32 %v307, 1.442695
    %v314 = vpow.pop %v313
    %v315 = vmul.f32 %v308, 1.442695
    %v316 = vpow.pop %v315
    %v317 = vmul.f32 %v309, 1.442695
    %v318 = vpow.pop %v317
    %v319 = vmul.f32 %v310, 1.442695
    %v320 = vpow.pop %v319
    %v321 = vadd.f32 %v312, 1.0
    %v322 = vadd.f32 %v314, 1.0
    %v323 = vadd.f32 %v316, 1.0
    %v324 = vadd.f32 %v318, 1.0
    %v325 = vadd.f32 %v320, 1.0
    %v326 = vrcp.pop %v321
    %v327 = vmul.f32 %v321, %v326
    %v328 = vsub.f32 1.0, %v327
    %v329 = vmul.f32 %v326, %v328
    %v330 = vadd.f32 %v326, %v329
    %vm331 = vweird.f32 %v321
    %vm332 = vweird.f32 %v326
    %vm333 = vmor %vm331, %vm332
    %v334 = vsel %vm333, %v326, %v330
    %v335 = vand.u32 2147483647, %v321
    %vm336 = vcmp.eq.f32.partialorder %v335, 8.507059e+37
    %v337 = vand.u32 %v321, 2147483648
    %v338 = vor.u32 1.1754944e-38, %v337
    %v339 = vsel %vm336, %v338, %v334
    %v340 = vmul.f32 1.0, %v339
    %v341 = vrcp.pop %v322
    %v342 = vmul.f32 %v322, %v341
    %v343 = vsub.f32 1.0, %v342
    %v344 = vmul.f32 %v341, %v343
    %v345 = vadd.f32 %v341, %v344
    %vm346 = vweird.f32 %v322
    %vm347 = vweird.f32 %v341
    %vm348 = vmor %vm346, %vm347
    %v349 = vsel %vm348, %v341, %v345
    %v350 = vand.u32 2147483647, %v322
    %vm351 = vcmp.eq.f32.partialorder %v350, 8.507059e+37
    %v352 = vand.u32 %v322, 2147483648
    %v353 = vor.u32 1.1754944e-38, %v352
    %v354 = vsel %vm351, %v353, %v349
    %v355 = vmul.f32 1.0, %v354
    %v356 = vrcp.pop %v323
    %v357 = vmul.f32 %v323, %v356
    %v358 = vsub.f32 1.0, %v357
    %v359 = vmul.f32 %v356, %v358
    %v360 = vadd.f32 %v356, %v359
    %vm361 = vweird.f32 %v323
    %vm362 = vweird.f32 %v356
    %vm363 = vmor %vm361, %vm362
    %v364 = vsel %vm363, %v356, %v360
    %v365 = vand.u32 2147483647, %v323
    %vm366 = vcmp.eq.f32.partialorder %v365, 8.507059e+37
    %v367 = vand.u32 %v323, 2147483648
    %v368 = vor.u32 1.1754944e-38, %v367
    %v369 = vsel %vm366, %v368, %v364
    %v370 = vmul.f32 1.0, %v369
    %v371 = vrcp.pop %v324
    %v372 = vmul.f32 %v324, %v371
    %v373 = vsub.f32 1.0, %v372
    %v374 = vmul.f32 %v371, %v373
    %v375 = vadd.f32 %v371, %v374
    %vm376 = vweird.f32 %v324
    %vm377 = vweird.f32 %v371
    %vm378 = vmor %vm376, %vm377
    %v379 = vsel %vm378, %v371, %v375
    %v380 = vand.u32 2147483647, %v324
    %vm381 = vcmp.eq.f32.partialorder %v380, 8.507059e+37
    %v382 = vand.u32 %v324, 2147483648
    %v383 = vor.u32 1.1754944e-38, %v382
    %v384 = vsel %vm381, %v383, %v379
    %v385 = vmul.f32 1.0, %v384
    %v386 = vrcp.pop %v325
    %v387 = vmul.f32 %v325, %v386
    %v388 = vsub.f32 1.0, %v387
    %v389 = vmul.f32 %v386, %v388
    %v390 = vadd.f32 %v386, %v389
    %vm391 = vweird.f32 %v325
    %vm392 = vweird.f32 %v386
    %vm393 = vmor %vm391, %vm392
    %v394 = vsel %vm393, %v386, %v390
    %v395 = vand.u32 2147483647, %v325
    %vm396 = vcmp.eq.f32.partialorder %v395, 8.507059e+37
    %v397 = vand.u32 %v325, 2147483648
    %v398 = vor.u32 1.1754944e-38, %v397
    %v399 = vsel %vm396, %v398, %v394
    %v400 = vmul.f32 1.0, %v399
    %v401 = vld [vmem:[%s5] sm:$0xff]
    %v402 = vld [vmem:[%s5 + $0x8] sm:$0x3]
    %v403 = vld [vmem:[%s6] sm:$0x1]
    %v405 = vperm.slane %v403, 0
    %vm407 = vcmask 80896
    %v409 = vsel %vm407, %v340, 0
    %v412 = vsel %vm407, %v355, 0
    %v415 = vsel %vm407, %v370, 0
    %v418 = vsel %vm407, %v385, 0
    %v421 = vsel %vm407, %v400, 0
    %vm423 = vcmask 1041408
    %v425 = vsel %vm423, %v402, 0
    %427 = vmatpush.msra.mxu0 0.0
    %428 = vmatpush.msra.mxu0 0.0
    %429 = vmatpush.msra.mxu0 0.0
    %430 = vmatpush.msra.mxu0 0.0
    %431 = vmatpush.msra.mxu0 0.0
    %432 = vmatpush.msra.mxu0 0.0
    %433 = vmatpush.msra.mxu0 0.0
    %434 = vmatpush.msra.mxu0 0.0
    %435 = vmatpush.msra.mxu0 0.0
    %436 = vmatpush.msra.mxu0 0.0
    %437 = vmatpush.msra.mxu0 0.0
    %438 = vmatpush.msra.mxu0 0.0
    %439 = vmatpush.msra.mxu0 0.0
    %440 = vmatpush.msra.mxu0 0.0
    %441 = vmatpush.msra.mxu0 %v425
    %442 = vmatpush.msra.mxu0 %v401
    %443 = vmatmul.f32.gmra.mxu0 %v409
    %v444 = vpop.f32.mrf.mxu0
    %v445 = vadd.f32 %v405, %v444
    %446 = vmatmul.f32.gmra.mxu0 %v412
    %v447 = vpop.f32.mrf.mxu0
    %v448 = vadd.f32 %v405, %v447
    %449 = vmatmul.f32.gmra.mxu0 %v415
    %v450 = vpop.f32.mrf.mxu0
    %v451 = vadd.f32 %v405, %v450
    %452 = vmatmul.f32.gmra.mxu0 %v418
    %v453 = vpop.f32.mrf.mxu0
    %v454 = vadd.f32 %v405, %v453
    %455 = vmatmul.f32.gmra.mxu0 %v421
    %v456 = vpop.f32.mrf.mxu0
    %v457 = vadd.f32 %v405, %v456
    %458 = vdwg.mxu0
    %v459 = vxor.u32 %v445, 2147483648
    %v460 = vxor.u32 %v448, 2147483648
    %v461 = vxor.u32 %v451, 2147483648
    %v462 = vxor.u32 %v454, 2147483648
    %v463 = vxor.u32 %v457, 2147483648
    %v464 = vmul.f32 %v459, 1.442695
    %v465 = vpow.pop %v464
    %v466 = vmul.f32 %v460, 1.442695
    %v467 = vpow.pop %v466
    %v468 = vmul.f32 %v461, 1.442695
    %v469 = vpow.pop %v468
    %v470 = vmul.f32 %v462, 1.442695
    %v471 = vpow.pop %v470
    %v472 = vmul.f32 %v463, 1.442695
    %v473 = vpow.pop %v472
    %v474 = vadd.f32 %v465, 1.0
    %v475 = vadd.f32 %v467, 1.0
    %v476 = vadd.f32 %v469, 1.0
    %v477 = vadd.f32 %v471, 1.0
    %v478 = vadd.f32 %v473, 1.0
    %v479 = vrcp.pop %v474
    %v480 = vmul.f32 %v474, %v479
    %v481 = vsub.f32 1.0, %v480
    %v482 = vmul.f32 %v479, %v481
    %v483 = vadd.f32 %v479, %v482
    %vm484 = vweird.f32 %v474
    %vm485 = vweird.f32 %v479
    %vm486 = vmor %vm484, %vm485
    %v487 = vsel %vm486, %v479, %v483
    %v488 = vand.u32 2147483647, %v474
    %vm489 = vcmp.eq.f32.partialorder %v488, 8.507059e+37
    %v490 = vand.u32 %v474, 2147483648
    %v491 = vor.u32 1.1754944e-38, %v490
    %v492 = vsel %vm489, %v491, %v487
    %v493 = vmul.f32 1.0, %v492
    %v494 = vrcp.pop %v475
    %v495 = vmul.f32 %v475, %v494
    %v496 = vsub.f32 1.0, %v495
    %v497 = vmul.f32 %v494, %v496
    %v498 = vadd.f32 %v494, %v497
    %vm499 = vweird.f32 %v475
    %vm500 = vweird.f32 %v494
    %vm501 = vmor %vm499, %vm500
    %v502 = vsel %vm501, %v494, %v498
    %v503 = vand.u32 2147483647, %v475
    %vm504 = vcmp.eq.f32.partialorder %v503, 8.507059e+37
    %v505 = vand.u32 %v475, 2147483648
    %v506 = vor.u32 1.1754944e-38, %v505
    %v507 = vsel %vm504, %v506, %v502
    %v508 = vmul.f32 1.0, %v507
    %v509 = vrcp.pop %v476
    %v510 = vmul.f32 %v476, %v509
    %v511 = vsub.f32 1.0, %v510
    %v512 = vmul.f32 %v509, %v511
    %v513 = vadd.f32 %v509, %v512
    %vm514 = vweird.f32 %v476
    %vm515 = vweird.f32 %v509
    %vm516 = vmor %vm514, %vm515
    %v517 = vsel %vm516, %v509, %v513
    %v518 = vand.u32 2147483647, %v476
    %vm519 = vcmp.eq.f32.partialorder %v518, 8.507059e+37
    %v520 = vand.u32 %v476, 2147483648
    %v521 = vor.u32 1.1754944e-38, %v520
    %v522 = vsel %vm519, %v521, %v517
    %v523 = vmul.f32 1.0, %v522
    %v524 = vrcp.pop %v477
    %v525 = vmul.f32 %v477, %v524
    %v526 = vsub.f32 1.0, %v525
    %v527 = vmul.f32 %v524, %v526
    %v528 = vadd.f32 %v524, %v527
    %vm529 = vweird.f32 %v477
    %vm530 = vweird.f32 %v524
    %vm531 = vmor %vm529, %vm530
    %v532 = vsel %vm531, %v524, %v528
    %v533 = vand.u32 2147483647, %v477
    %vm534 = vcmp.eq.f32.partialorder %v533, 8.507059e+37
    %v535 = vand.u32 %v477, 2147483648
    %v536 = vor.u32 1.1754944e-38, %v535
    %v537 = vsel %vm534, %v536, %v532
    %v538 = vmul.f32 1.0, %v537
    %v539 = vrcp.pop %v478
    %v540 = vmul.f32 %v478, %v539
    %v541 = vsub.f32 1.0, %v540
    %v542 = vmul.f32 %v539, %v541
    %v543 = vadd.f32 %v539, %v542
    %vm544 = vweird.f32 %v478
    %vm545 = vweird.f32 %v539
    %vm546 = vmor %vm544, %vm545
    %v547 = vsel %vm546, %v539, %v543
    %v548 = vand.u32 2147483647, %v478
    %vm549 = vcmp.eq.f32.partialorder %v548, 8.507059e+37
    %v550 = vand.u32 %v478, 2147483648
    %v551 = vor.u32 1.1754944e-38, %v550
    %v552 = vsel %vm549, %v551, %v547
    %v553 = vmul.f32 1.0, %v552
    %v554 = vld [vmem:[%s7] sm:$0xff]
    %v555 = vld [vmem:[%s7 + $0x8] sm:$0xff]
    %v556 = vld [vmem:[%s7 + $0x10] sm:$0xff]
    %v557 = vld [vmem:[%s7 + $0x18] sm:$0xff]
    %v558 = vld [vmem:[%s7 + $0x20] sm:$0xf]
    %v559 = vld [vmem:[%s7 + $0x28] sm:$0xf]
    %v560 = vld [vmem:[%s8] sm:$0x3]
    %v562 = vperm.slane %v560, 0
    %v563 = vperm.slane %v560, 1
    %v567 = vsel %vm254, %v493, 0
    %v570 = vsel %vm254, %v508, 0
    %v573 = vsel %vm254, %v523, 0
    %v576 = vsel %vm254, %v538, 0
    %v579 = vsel %vm254, %v553, 0
    %v582 = vsel %vm270, %v558, 0
    %v585 = vsel %vm270, %v559, 0
    %587 = vmatpush.msra.mxu0 0.0
    %588 = vmatpush.msra.mxu0 0.0
    %589 = vmatpush.msra.mxu0 0.0
    %590 = vmatpush.msra.mxu0 0.0
    %591 = vmatpush.msra.mxu0 0.0
    %592 = vmatpush.msra.mxu0 0.0
    %593 = vmatpush.msra.mxu0 0.0
    %594 = vmatpush.msra.mxu0 0.0
    %595 = vmatpush.msra.mxu0 0.0
    %596 = vmatpush.msra.mxu0 0.0
    %597 = vmatpush.msra.mxu0 0.0
    %598 = vmatpush.msra.mxu0 0.0
    %599 = vmatpush.msra.mxu0 0.0
    %600 = vmatpush.msra.mxu0 %v582
    %601 = vmatpush.msra.mxu0 %v556
    %602 = vmatpush.msra.mxu0 %v554
    %603 = vmatmul.f32.gmra.mxu0 %v567
    %v604 = vpop.f32.mrf.mxu0
    %v605 = vadd.f32 %v562, %v604
    %606 = vmatmul.f32.gmra.mxu0 %v570
    %v607 = vpop.f32.mrf.mxu0
    %v608 = vadd.f32 %v562, %v607
    %609 = vmatmul.f32.gmra.mxu0 %v573
    %v610 = vpop.f32.mrf.mxu0
    %v611 = vadd.f32 %v562, %v610
    %612 = vmatmul.f32.gmra.mxu0 %v576
    %v613 = vpop.f32.mrf.mxu0
    %v614 = vadd.f32 %v562, %v613
    %615 = vmatmul.f32.gmra.mxu0 %v579
    %v616 = vpop.f32.mrf.mxu0
    %v617 = vadd.f32 %v562, %v616
    %618 = vdwg.mxu0
    %619 = vmatpush.msra.mxu0 0.0
    %620 = vmatpush.msra.mxu0 0.0
    %621 = vmatpush.msra.mxu0 0.0
    %622 = vmatpush.msra.mxu0 0.0
    %623 = vmatpush.msra.mxu0 0.0
    %624 = vmatpush.msra.mxu0 0.0
    %625 = vmatpush.msra.mxu0 0.0
    %626 = vmatpush.msra.mxu0 0.0
    %627 = vmatpush.msra.mxu0 0.0
    %628 = vmatpush.msra.mxu0 0.0
    %629 = vmatpush.msra.mxu0 0.0
    %630 = vmatpush.msra.mxu0 0.0
    %631 = vmatpush.msra.mxu0 0.0
    %632 = vmatpush.msra.mxu0 %v585
    %633 = vmatpush.msra.mxu0 %v557
    %634 = vmatpush.msra.mxu0 %v555
    %635 = vmatmul.f32.gmra.mxu0 %v567
    %v636 = vpop.f32.mrf.mxu0
    %v637 = vadd.f32 %v563, %v636
    %638 = vmatmul.f32.gmra.mxu0 %v570
    %v639 = vpop.f32.mrf.mxu0
    %v640 = vadd.f32 %v563, %v639
    %641 = vmatmul.f32.gmra.mxu0 %v573
    %v642 = vpop.f32.mrf.mxu0
    %v643 = vadd.f32 %v563, %v642
    %644 = vmatmul.f32.gmra.mxu0 %v576
    %v645 = vpop.f32.mrf.mxu0
    %v646 = vadd.f32 %v563, %v645
    %647 = vmatmul.f32.gmra.mxu0 %v579
    %v648 = vpop.f32.mrf.mxu0
    %v649 = vadd.f32 %v563, %v648
    %650 = vdwg.mxu0
    %651 = vst [vmem:[#allocation2] sm:$0xff] %v605
    %652 = vst.msk [vmem:[#allocation2 + $0x8] sm:$0xff] %vm72, %v637
    %653 = vst [vmem:[#allocation2 + $0x10] sm:$0xff] %v608
    %654 = vst.msk [vmem:[#allocation2 + $0x18] sm:$0xff] %vm72, %v640
    %655 = vst [vmem:[#allocation2 + $0x20] sm:$0xff] %v611
    %656 = vst.msk [vmem:[#allocation2 + $0x28] sm:$0xff] %vm72, %v643
    %657 = vst [vmem:[#allocation2 + $0x30] sm:$0xff] %v614
    %658 = vst.msk [vmem:[#allocation2 + $0x38] sm:$0xff] %vm72, %v646
    %659 = vst [vmem:[#allocation2 + $0x40] sm:$0xff] %v617
    %660 = vst.msk [vmem:[#allocation2 + $0x48] sm:$0xff] %vm72, %v649
    // Predicated region
    $region38: #{autoencoder_forward.1} parent=1 // pred_check
      _
    $region39: #{autoencoder_forward.1} parent=1 // pred_check_branch
      %662 = sbr.rel (0) target = $region41
    $region40: #{autoencoder_forward.1} parent=1 // pred_region
      %664 = vsyncadd [#allocation3], 0
      %s665 = sshll.u32 [#allocation2], 4
      %s666 = int_to_ptr.vmem [resolvable:$true] %s665
      %s667 = sshll.u32 %s9, 4
      %s668 = int_to_ptr.hbm [resolvable:$true] %s667
      %673 = dma.vmem_to_hbm [thread:$0]  %s666, 1280, %s668, [#allocation3], 256, 256, 16
    $region41: #{autoencoder_forward.1} parent=1 // pred_fallthru
      _
    // Predicated region
    $region42: #{autoencoder_forward.1} parent=1 // pred_check
      _
    $region43: #{autoencoder_forward.1} parent=1 // pred_check_branch
      %675 = sbr.rel (0) target = $region45
    $region44: #{autoencoder_forward.1} parent=1 // pred_region
      %677 = dma.done [#allocation3], 1280
    $region45: #{autoencoder_forward.1} parent=1 // pred_fallthru
      _
    %678 = vsyncpa [#allocation3], 1

</llo_original>
